<compile_context>
chip_gen: v6e
topology: v6e:2x2x1
jax: 0.10.0
libtpu: 0.0.40
codegen_flags: <defaults>
</compile_context>

<pallas_src>
import functools

import jax
import jax.numpy as jnp
from jax.experimental import pallas as pl
from jax.experimental.pallas import tpu as pltpu

BCE_WEIGHT = 1.0
ALIGN_WEIGHT = 1.0
EPS = 1e-8


def _round_up(x, m):
    return ((x + m - 1) // m) * m


def _vmem_capacity_bytes():
    try:
        info = pltpu.get_tpu_info()
        v = getattr(info, "vmem_capacity_bytes", None)
        if v:
            return int(v)
    except Exception:
        pass
    return 64 << 20  # conservative (v7x-sized) fallback


def _tensorcores_per_chip():
    # v7x has 2 TensorCores per chip; v5e/v6e have 1. Correctness does not
    # depend on getting this right (the parallel axis is valid for any count).
    try:
        info = pltpu.get_tpu_info()
        for name in ("num_cores", "core_count", "tensorcores_per_chip",
                     "num_tensorcores"):
            v = getattr(info, name, None)
            if isinstance(v, int) and v > 0:
                return min(int(v), 2)
    except Exception:
        pass
    try:
        kind = jax.devices()[0].device_kind.lower()
        if "v7" in kind or "7x" in kind:
            return 2
    except Exception:
        pass
    return 1


def _da_partial_kernel(logits_ref, targets_ref, out_ref, *,
                       total_rows, tb, tiles_per_core):
    core = pl.program_id(0)
    i = pl.program_id(1)
    tile_start = (core * tiles_per_core + i) * tb

    @pl.when(i == 0)
    def _init():
        out_ref[...] = jnp.zeros_like(out_ref)

    def _colsum(z):
        # Collapse [TB, C] -> [8, C] with vreg-wise adds only (no per-step
        # cross-sublane XLU reduce; the 8-sublane collapse happens once in the
        # JAX epilogue).
        rows, cls = z.shape
        return jnp.sum(z.reshape(rows // 8, 8, cls), axis=0)

    def _accumulate(masked):
        x = logits_ref[...].astype(jnp.float32)   # [TB, C]
        y = targets_ref[...].astype(jnp.float32)  # [TB, C]
        if masked:
            rows, cls = x.shape
            row = jax.lax.broadcasted_iota(jnp.int32, (rows, cls), 0) + tile_start
            valid = row < total_rows
            # Zero inputs *before* the transcendentals so garbage padding
            # (NaN/Inf) cannot poison the accumulators.
            x = jnp.where(valid, x, 0.0)
            y = jnp.where(valid, y, 0.0)

        # Targets first (no transcendentals needed).
        out_ref[0, 2] += _colsum(y)

        # Shared exp(-|x|): feeds both the stable BCE log term and the sigmoid.
        e = jnp.exp(-jnp.abs(x))
        bce = jnp.maximum(x, 0.0) - x * y + jnp.log1p(e)   # stable BCE-with-logits
        if masked:
            bce = jnp.where(valid, bce, 0.0)
        out_ref[0, 0] += _colsum(bce)

        r = pl.reciprocal(1.0 + e, approx=True)            # EUP vrcp
        probs = jnp.where(x >= 0.0, r, e * r)              # sigmoid(x)
        if masked:
            probs = jnp.where(valid, probs, 0.0)
        out_ref[0, 1] += _colsum(probs)

    # Fast path: tile fully inside the real batch -> no mask work at all.
    @pl.when(tile_start + tb <= total_rows)
    def _fast():
        _accumulate(False)

    # Masked path: ragged last tile and fully-out-of-range (clamped) tiles.
    @pl.when(tile_start + tb > total_rows)
    def _ragged():
        _accumulate(True)


def distribution_alignment_loss(logits, targets, *, tb_cap=4096):
    B, C = logits.shape
    assert targets.shape == (B, C)

    it_l = jnp.dtype(logits.dtype).itemsize
    it_t = jnp.dtype(targets.dtype).itemsize

    # Minimum sublane multiple for the narrowest input dtype (8 for f32,
    # 16 for bf16, 32 for int8/fp8).
    sub = max(8, 32 // min(it_l, it_t))

    vmem_cap = _vmem_capacity_bytes()
    # ~1/4 of VMEM for the 2 inputs x 2 pipeline buffers: ~32 MiB on v5e/v6e
    # (128 MiB VMEM), ~16 MiB on v7x (64 MiB VMEM).
    tile_budget = min(32 << 20, vmem_cap // 4)
    tb_from_budget = max(sub, (tile_budget // (2 * C * (it_l + it_t))) // sub * sub)
    TB = _round_up(min(tb_cap, tb_from_budget, _round_up(B, sub)), sub)

    n_blocks = pl.cdiv(B, TB)
    num_cores = max(1, min(_tensorcores_per_chip(), n_blocks))
    tiles_per_core = pl.cdiv(n_blocks, num_cores)
    last_block = n_blocks - 1

    def in_index_map(core, i):
        # Clamp fully-out-of-range logical blocks to the last real block; the
        # in-kernel mask zeroes their contribution.
        b = core * tiles_per_core + i
        return (jnp.minimum(b, last_block), 0)

    vmem_estimate = (2 * TB * C * (it_l + it_t)   # double-buffered input tiles
                     + 2 * 3 * 8 * C * 4          # partial-sum output block
                     + (1 << 16))                 # slack
    vmem_ceiling = min(64 << 20, int(0.6 * vmem_cap))
    vmem_limit = int(min(max(2 * vmem_estimate, 8 << 20), vmem_ceiling))

    cost = pl.CostEstimate(
        flops=12 * B * C,
        transcendentals=3 * B * C,
        bytes_accessed=B * C * (it_l + it_t) + num_cores * 3 * 8 * C * 4,
    )

    kernel = functools.partial(_da_partial_kernel, total_rows=B, tb=TB,
                               tiles_per_core=tiles_per_core)

    partials = pl.pallas_call(
        kernel,
        out_shape=jax.ShapeDtypeStruct((num_cores, 3, 8, C), jnp.float32),
        grid_spec=pltpu.PrefetchScalarGridSpec(
            num_scalar_prefetch=0,
            grid=(num_cores, tiles_per_core),
            in_specs=[
                pl.BlockSpec((TB, C), in_index_map),
                pl.BlockSpec((TB, C), in_index_map),
            ],
            out_specs=pl.BlockSpec((1, 3, 8, C), lambda core, i: (core, 0, 0, 0)),
        ),
        compiler_params=pltpu.CompilerParams(
            dimension_semantics=("parallel", "arbitrary"),
            vmem_limit_bytes=vmem_limit,
        ),
        cost_estimate=cost,
    )(logits, targets)

    # Tiny O(C) combine / normalize / KL epilogue in plain JAX.
    sums = jnp.sum(partials, axis=(0, 2))          # [3, C]
    b = jnp.float32(B)

    # BCEWithLogitsLoss (mean over all B*C elements).
    bce = jnp.sum(sums[0]) / (b * C)

    # Distribution alignment: column means -> normalized distributions -> KL.
    pred = sums[1] / b
    true = sums[2] / b
    pred = pred / (jnp.sum(pred) + EPS)
    true = true / (jnp.sum(true) + EPS)
    log_pred = jnp.log(pred + EPS)
    safe_true = jnp.where(true > 0.0, true, 1.0)   # safe log
    kl_pw = jnp.where(true > 0.0, true * (jnp.log(safe_true) - log_pred), 0.0)
    # PyTorch KLDivLoss(reduction='batchmean') on a 1-D [C] input: /C.
    kl = jnp.sum(kl_pw) / C

    return BCE_WEIGHT * bce + ALIGN_WEIGHT * kl


def _reference_loss(logits, targets):
    x = logits.astype(jnp.float32)
    y = targets.astype(jnp.float32)
    B, C = x.shape
    bce = jnp.mean(jnp.maximum(x, 0.0) - x * y + jnp.log1p(jnp.exp(-jnp.abs(x))))
    probs = jax.nn.sigmoid(x)
    pred = jnp.mean(probs, axis=0)
    true = jnp.mean(y, axis=0)
    pred = pred / (jnp.sum(pred) + EPS)
    true = true / (jnp.sum(true) + EPS)
    log_pred = jnp.log(pred + EPS)
    kl_pw = jnp.where(true > 0,
                      true * (jnp.log(jnp.where(true > 0, true, 1.0)) - log_pred),
                      0.0)
    kl = jnp.sum(kl_pw) / C
    return BCE_WEIGHT * bce + ALIGN_WEIGHT * kl


if __name__ == "__main__":
    key = jax.random.PRNGKey(0)
    k1, k2, k3, k4, k5, k6 = jax.random.split(key, 6)

    # Approx reciprocal introduces ~1e-4 relative error in the sigmoid, so the
    # tolerance is loosened vs. bitwise parity with the exact divide.
    RTOL, ATOL = 2e-3, 5e-4

    # Case 1: the module's nominal small shape (single tile).
    batch, num_classes = 8, 128
    logits = jax.random.normal(k1, (batch, num_classes), dtype=jnp.float32)
    targets = jax.random.bernoulli(k2, 0.3, (batch, num_classes)).astype(jnp.float32)
    loss = distribution_alignment_loss(logits, targets)
    jax.block_until_ready(loss)
    ref = _reference_loss(logits, targets)
    assert jnp.allclose(loss, ref, rtol=RTOL, atol=ATOL), (loss, ref)

    # Case 2: multi-tile path with a ragged last tile (running accumulators,
    # pl.when fast/masked split, multi-core grid axis when on v7x).
    logits2 = jax.random.normal(k3, (40, 128), dtype=jnp.float32)
    targets2 = jax.random.bernoulli(k4, 0.3, (40, 128)).astype(jnp.float32)
    loss2 = distribution_alignment_loss(logits2, targets2, tb_cap=16)
    jax.block_until_ready(loss2)
    ref2 = _reference_loss(logits2, targets2)
    assert jnp.allclose(loss2, ref2, rtol=RTOL, atol=ATOL), (loss2, ref2)

    # Case 3: bf16 inputs (halved HBM traffic; kernel widens to f32 in VMEM).
    logits3 = jax.random.normal(k5, (24, 128), dtype=jnp.bfloat16)
    targets3 = jax.random.bernoulli(k6, 0.3, (24, 128)).astype(jnp.bfloat16)
    loss3 = distribution_alignment_loss(logits3, targets3, tb_cap=16)
    jax.block_until_ready(loss3)
    ref3 = _reference_loss(logits3, targets3)
    assert jnp.allclose(loss3, ref3, rtol=RTOL, atol=ATOL), (loss3, ref3)

    print("KERNEL_OK")
</pallas_src>

<mosaic_0001>
module attributes {stable_mosaic.version = 11 : i64} {
  func.func @_da_partial_kernel(%arg0: i32, %arg1: i32, %arg2: memref<8x128xf32, #tpu.memory_space<vmem>>, %arg3: memref<8x128xf32, #tpu.memory_space<vmem>>, %arg4: memref<1x3x8x128xf32, #tpu.memory_space<vmem>>) attributes {dimension_semantics = [#tpu.dimension_semantics<parallel>, #tpu.dimension_semantics<arbitrary>], iteration_bounds = array<i64: 1, 1>, scalar_prefetch = 0 : i64, scratch_operands = 0 : i64, tpu.core_type = #tpu.core_type<tc>, window_params = [{transform_indices = @transform_0, window_bounds = array<i64: 8, 128>}, {transform_indices = @transform_1, window_bounds = array<i64: 8, 128>}, {transform_indices = @transform_2, window_bounds = array<i64: 1, 3, 8, 128>}]} {
    %c1_i32 = arith.constant 1 : i32
    %0 = arith.muli %arg0, %c1_i32 : i32
    %1 = arith.addi %0, %arg1 : i32
    %c8_i32 = arith.constant 8 : i32
    %2 = arith.muli %1, %c8_i32 : i32
    %c0_i32 = arith.constant 0 : i32
    %3 = arith.cmpi eq, %arg1, %c0_i32 : i32
    %4 = arith.extui %3 : i1 to i32
    %c0_i32_0 = arith.constant 0 : i32
    %5 = arith.cmpi ne, %4, %c0_i32_0 : i32
    scf.if %5 {
      %cst = arith.constant 0.000000e+00 : f32
      %14 = vector.broadcast %cst : f32 to vector<1x3x8x128xf32>
      %c0 = arith.constant 0 : index
      %c0_7 = arith.constant 0 : index
      %c0_8 = arith.constant 0 : index
      %c0_9 = arith.constant 0 : index
      %15 = vector.load %arg4[%c0, %c0_7, %c0_8, %c0_9] : memref<1x3x8x128xf32, #tpu.memory_space<vmem>>, vector<1x3x8x128xf32>
      tpu.vector_store %arg4[%c0, %c0_7, %c0_8, %c0_9], %14 {strides = array<i32>} : memref<1x3x8x128xf32, #tpu.memory_space<vmem>>, vector<1x3x8x128xf32>,
    } else {
    }
    %c8_i32_1 = arith.constant 8 : i32
    %6 = arith.addi %2, %c8_i32_1 : i32
    %c8_i32_2 = arith.constant 8 : i32
    %7 = arith.cmpi sle, %6, %c8_i32_2 : i32
    %8 = arith.extui %7 : i1 to i32
    %c0_i32_3 = arith.constant 0 : i32
    %9 = arith.cmpi ne, %8, %c0_i32_3 : i32
    scf.if %9 {
      %c0 = arith.constant 0 : index
      %c0_7 = arith.constant 0 : index
      %14 = vector.load %arg2[%c0, %c0_7] : memref<8x128xf32, #tpu.memory_space<vmem>>, vector<8x128xf32>
      %c0_8 = arith.constant 0 : index
      %c0_9 = arith.constant 0 : index
      %15 = vector.load %arg3[%c0_8, %c0_9] : memref<8x128xf32, #tpu.memory_space<vmem>>, vector<8x128xf32>
      %c0_10 = arith.constant 0 : index
      %c2 = arith.constant 2 : index
      %c0_11 = arith.constant 0 : index
      %c0_12 = arith.constant 0 : index
      %16 = vector.load %arg4[%c0_10, %c2, %c0_11, %c0_12] : memref<1x3x8x128xf32, #tpu.memory_space<vmem>>, vector<1x1x8x128xf32>
      %17 = vector.shape_cast %16 : vector<1x1x8x128xf32> to vector<8x128xf32>
      %18 = vector.shape_cast %15 : vector<8x128xf32> to vector<1x8x128xf32>
      %cst = arith.constant dense<0.000000e+00> : vector<8x128xf32>
      %19 = vector.multi_reduction <add>, %18, %cst [0] : vector<1x8x128xf32> to vector<8x128xf32>
      %20 = arith.addf %17, %19 : vector<8x128xf32>
      %c0_13 = arith.constant 0 : index
      %c2_14 = arith.constant 2 : index
      %c0_15 = arith.constant 0 : index
      %c0_16 = arith.constant 0 : index
      %21 = vector.load %arg4[%c0_13, %c2_14, %c0_15, %c0_16] : memref<1x3x8x128xf32, #tpu.memory_space<vmem>>, vector<1x1x8x128xf32>
      %22 = vector.shape_cast %21 : vector<1x1x8x128xf32> to vector<8x128xf32>
      %23 = vector.shape_cast %20 : vector<8x128xf32> to vector<1x1x8x128xf32>
      tpu.vector_store %arg4[%c0_13, %c2_14, %c0_15, %c0_16], %23 {strides = array<i32>} : memref<1x3x8x128xf32, #tpu.memory_space<vmem>>, vector<1x1x8x128xf32>,
      %24 = math.absf %14 : vector<8x128xf32>
      %cst_17 = arith.constant 0.000000e+00 : f32
      %25 = vector.broadcast %cst_17 : f32 to vector<8x128xf32>
      %26 = arith.subf %25, %24 : vector<8x128xf32>
      %27 = math.exp %26 : vector<8x128xf32>
      %cst_18 = arith.constant 0.000000e+00 : f32
      %28 = vector.broadcast %cst_18 : f32 to vector<8x128xf32>
      %29 = arith.maximumf %14, %28 : vector<8x128xf32>
      %30 = arith.mulf %14, %15 : vector<8x128xf32>
      %31 = arith.subf %29, %30 : vector<8x128xf32>
      %32 = math.log1p %27 : vector<8x128xf32>
      %33 = arith.addf %31, %32 : vector<8x128xf32>
      %c0_19 = arith.constant 0 : index
      %c0_20 = arith.constant 0 : index
      %c0_21 = arith.constant 0 : index
      %c0_22 = arith.constant 0 : index
      %34 = vector.load %arg4[%c0_19, %c0_20, %c0_21, %c0_22] : memref<1x3x8x128xf32, #tpu.memory_space<vmem>>, vector<1x1x8x128xf32>
      %35 = vector.shape_cast %34 : vector<1x1x8x128xf32> to vector<8x128xf32>
      %36 = vector.shape_cast %33 : vector<8x128xf32> to vector<1x8x128xf32>
      %cst_23 = arith.constant dense<0.000000e+00> : vector<8x128xf32>
      %37 = vector.multi_reduction <add>, %36, %cst_23 [0] : vector<1x8x128xf32> to vector<8x128xf32>
      %38 = arith.addf %35, %37 : vector<8x128xf32>
      %c0_24 = arith.constant 0 : index
      %c0_25 = arith.constant 0 : index
      %c0_26 = arith.constant 0 : index
      %c0_27 = arith.constant 0 : index
      %39 = vector.load %arg4[%c0_24, %c0_25, %c0_26, %c0_27] : memref<1x3x8x128xf32, #tpu.memory_space<vmem>>, vector<1x1x8x128xf32>
      %40 = vector.shape_cast %39 : vector<1x1x8x128xf32> to vector<8x128xf32>
      %41 = vector.shape_cast %38 : vector<8x128xf32> to vector<1x1x8x128xf32>
      tpu.vector_store %arg4[%c0_24, %c0_25, %c0_26, %c0_27], %41 {strides = array<i32>} : memref<1x3x8x128xf32, #tpu.memory_space<vmem>>, vector<1x1x8x128xf32>,
      %cst_28 = arith.constant 1.000000e+00 : f32
      %42 = vector.broadcast %cst_28 : f32 to vector<8x128xf32>
      %43 = arith.addf %42, %27 : vector<8x128xf32>
      %44 = tpu.reciprocal %43 {approx = true} : vector<8x128xf32> -> vector<8x128xf32>
      %cst_29 = arith.constant 0.000000e+00 : f32
      %45 = vector.broadcast %cst_29 : f32 to vector<8x128xf32>
      %46 = arith.cmpf oge, %14, %45 : vector<8x128xf32>
      %47 = arith.mulf %27, %44 : vector<8x128xf32>
      %48 = arith.select %46, %44, %47 : vector<8x128xi1>, vector<8x128xf32>
      %c0_30 = arith.constant 0 : index
      %c1 = arith.constant 1 : index
      %c0_31 = arith.constant 0 : index
      %c0_32 = arith.constant 0 : index
      %49 = vector.load %arg4[%c0_30, %c1, %c0_31, %c0_32] : memref<1x3x8x128xf32, #tpu.memory_space<vmem>>, vector<1x1x8x128xf32>
      %50 = vector.shape_cast %49 : vector<1x1x8x128xf32> to vector<8x128xf32>
      %51 = vector.shape_cast %48 : vector<8x128xf32> to vector<1x8x128xf32>
      %cst_33 = arith.constant dense<0.000000e+00> : vector<8x128xf32>
      %52 = vector.multi_reduction <add>, %51, %cst_33 [0] : vector<1x8x128xf32> to vector<8x128xf32>
      %53 = arith.addf %50, %52 : vector<8x128xf32>
      %c0_34 = arith.constant 0 : index
      %c1_35 = arith.constant 1 : index
      %c0_36 = arith.constant 0 : index
      %c0_37 = arith.constant 0 : index
      %54 = vector.load %arg4[%c0_34, %c1_35, %c0_36, %c0_37] : memref<1x3x8x128xf32, #tpu.memory_space<vmem>>, vector<1x1x8x128xf32>
      %55 = vector.shape_cast %54 : vector<1x1x8x128xf32> to vector<8x128xf32>
      %56 = vector.shape_cast %53 : vector<8x128xf32> to vector<1x1x8x128xf32>
      tpu.vector_store %arg4[%c0_34, %c1_35, %c0_36, %c0_37], %56 {strides = array<i32>} : memref<1x3x8x128xf32, #tpu.memory_space<vmem>>, vector<1x1x8x128xf32>,
    } else {
    }
    %c8_i32_4 = arith.constant 8 : i32
    %10 = arith.addi %2, %c8_i32_4 : i32
    %c8_i32_5 = arith.constant 8 : i32
    %11 = arith.cmpi sgt, %10, %c8_i32_5 : i32
    %12 = arith.extui %11 : i1 to i32
    %c0_i32_6 = arith.constant 0 : i32
    %13 = arith.cmpi ne, %12, %c0_i32_6 : i32
    scf.if %13 {
      %c0 = arith.constant 0 : index
      %c0_7 = arith.constant 0 : index
      %14 = vector.load %arg2[%c0, %c0_7] : memref<8x128xf32, #tpu.memory_space<vmem>>, vector<8x128xf32>
      %c0_8 = arith.constant 0 : index
      %c0_9 = arith.constant 0 : index
      %15 = vector.load %arg3[%c0_8, %c0_9] : memref<8x128xf32, #tpu.memory_space<vmem>>, vector<8x128xf32>
      %16 = tpu.iota {dimensions = array<i32: 0>} : vector<8x128xi32>
      %17 = vector.broadcast %2 : i32 to vector<8x128xi32>
      %18 = arith.addi %16, %17 : vector<8x128xi32>
      %c8_i32_10 = arith.constant 8 : i32
      %19 = vector.broadcast %c8_i32_10 : i32 to vector<8x128xi32>
      %20 = arith.cmpi slt, %18, %19 : vector<8x128xi32>
      %cst = arith.constant 0.000000e+00 : f32
      %21 = vector.broadcast %cst : f32 to vector<8x128xf32>
      %22 = arith.select %20, %14, %21 : vector<8x128xi1>, vector<8x128xf32>
      %cst_11 = arith.constant 0.000000e+00 : f32
      %23 = vector.broadcast %cst_11 : f32 to vector<8x128xf32>
      %24 = arith.select %20, %15, %23 : vector<8x128xi1>, vector<8x128xf32>
      %c0_12 = arith.constant 0 : index
      %c2 = arith.constant 2 : index
      %c0_13 = arith.constant 0 : index
      %c0_14 = arith.constant 0 : index
      %25 = vector.load %arg4[%c0_12, %c2, %c0_13, %c0_14] : memref<1x3x8x128xf32, #tpu.memory_space<vmem>>, vector<1x1x8x128xf32>
      %26 = vector.shape_cast %25 : vector<1x1x8x128xf32> to vector<8x128xf32>
      %27 = vector.shape_cast %24 : vector<8x128xf32> to vector<1x8x128xf32>
      %cst_15 = arith.constant dense<0.000000e+00> : vector<8x128xf32>
      %28 = vector.multi_reduction <add>, %27, %cst_15 [0] : vector<1x8x128xf32> to vector<8x128xf32>
      %29 = arith.addf %26, %28 : vector<8x128xf32>
      %c0_16 = arith.constant 0 : index
      %c2_17 = arith.constant 2 : index
      %c0_18 = arith.constant 0 : index
      %c0_19 = arith.constant 0 : index
      %30 = vector.load %arg4[%c0_16, %c2_17, %c0_18, %c0_19] : memref<1x3x8x128xf32, #tpu.memory_space<vmem>>, vector<1x1x8x128xf32>
      %31 = vector.shape_cast %30 : vector<1x1x8x128xf32> to vector<8x128xf32>
      %32 = vector.shape_cast %29 : vector<8x128xf32> to vector<1x1x8x128xf32>
      tpu.vector_store %arg4[%c0_16, %c2_17, %c0_18, %c0_19], %32 {strides = array<i32>} : memref<1x3x8x128xf32, #tpu.memory_space<vmem>>, vector<1x1x8x128xf32>,
      %33 = math.absf %22 : vector<8x128xf32>
      %cst_20 = arith.constant 0.000000e+00 : f32
      %34 = vector.broadcast %cst_20 : f32 to vector<8x128xf32>
      %35 = arith.subf %34, %33 : vector<8x128xf32>
      %36 = math.exp %35 : vector<8x128xf32>
      %cst_21 = arith.constant 0.000000e+00 : f32
      %37 = vector.broadcast %cst_21 : f32 to vector<8x128xf32>
      %38 = arith.maximumf %22, %37 : vector<8x128xf32>
      %39 = arith.mulf %22, %24 : vector<8x128xf32>
      %40 = arith.subf %38, %39 : vector<8x128xf32>
      %41 = math.log1p %36 : vector<8x128xf32>
      %42 = arith.addf %40, %41 : vector<8x128xf32>
      %cst_22 = arith.constant 0.000000e+00 : f32
      %43 = vector.broadcast %cst_22 : f32 to vector<8x128xf32>
      %44 = arith.select %20, %42, %43 : vector<8x128xi1>, vector<8x128xf32>
      %c0_23 = arith.constant 0 : index
      %c0_24 = arith.constant 0 : index
      %c0_25 = arith.constant 0 : index
      %c0_26 = arith.constant 0 : index
      %45 = vector.load %arg4[%c0_23, %c0_24, %c0_25, %c0_26] : memref<1x3x8x128xf32, #tpu.memory_space<vmem>>, vector<1x1x8x128xf32>
      %46 = vector.shape_cast %45 : vector<1x1x8x128xf32> to vector<8x128xf32>
      %47 = vector.shape_cast %44 : vector<8x128xf32> to vector<1x8x128xf32>
      %cst_27 = arith.constant dense<0.000000e+00> : vector<8x128xf32>
      %48 = vector.multi_reduction <add>, %47, %cst_27 [0] : vector<1x8x128xf32> to vector<8x128xf32>
      %49 = arith.addf %46, %48 : vector<8x128xf32>
      %c0_28 = arith.constant 0 : index
      %c0_29 = arith.constant 0 : index
      %c0_30 = arith.constant 0 : index
      %c0_31 = arith.constant 0 : index
      %50 = vector.load %arg4[%c0_28, %c0_29, %c0_30, %c0_31] : memref<1x3x8x128xf32, #tpu.memory_space<vmem>>, vector<1x1x8x128xf32>
      %51 = vector.shape_cast %50 : vector<1x1x8x128xf32> to vector<8x128xf32>
      %52 = vector.shape_cast %49 : vector<8x128xf32> to vector<1x1x8x128xf32>
      tpu.vector_store %arg4[%c0_28, %c0_29, %c0_30, %c0_31], %52 {strides = array<i32>} : memref<1x3x8x128xf32, #tpu.memory_space<vmem>>, vector<1x1x8x128xf32>,
      %cst_32 = arith.constant 1.000000e+00 : f32
      %53 = vector.broadcast %cst_32 : f32 to vector<8x128xf32>
      %54 = arith.addf %53, %36 : vector<8x128xf32>
      %55 = tpu.reciprocal %54 {approx = true} : vector<8x128xf32> -> vector<8x128xf32>
      %cst_33 = arith.constant 0.000000e+00 : f32
      %56 = vector.broadcast %cst_33 : f32 to vector<8x128xf32>
      %57 = arith.cmpf oge, %22, %56 : vector<8x128xf32>
      %58 = arith.mulf %36, %55 : vector<8x128xf32>
      %59 = arith.select %57, %55, %58 : vector<8x128xi1>, vector<8x128xf32>
      %cst_34 = arith.constant 0.000000e+00 : f32
      %60 = vector.broadcast %cst_34 : f32 to vector<8x128xf32>
      %61 = arith.select %20, %59, %60 : vector<8x128xi1>, vector<8x128xf32>
      %c0_35 = arith.constant 0 : index
      %c1 = arith.constant 1 : index
      %c0_36 = arith.constant 0 : index
      %c0_37 = arith.constant 0 : index
      %62 = vector.load %arg4[%c0_35, %c1, %c0_36, %c0_37] : memref<1x3x8x128xf32, #tpu.memory_space<vmem>>, vector<1x1x8x128xf32>
      %63 = vector.shape_cast %62 : vector<1x1x8x128xf32> to vector<8x128xf32>
      %64 = vector.shape_cast %61 : vector<8x128xf32> to vector<1x8x128xf32>
      %cst_38 = arith.constant dense<0.000000e+00> : vector<8x128xf32>
      %65 = vector.multi_reduction <add>, %64, %cst_38 [0] : vector<1x8x128xf32> to vector<8x128xf32>
      %66 = arith.addf %63, %65 : vector<8x128xf32>
      %c0_39 = arith.constant 0 : index
      %c1_40 = arith.constant 1 : index
      %c0_41 = arith.constant 0 : index
      %c0_42 = arith.constant 0 : index
      %67 = vector.load %arg4[%c0_39, %c1_40, %c0_41, %c0_42] : memref<1x3x8x128xf32, #tpu.memory_space<vmem>>, vector<1x1x8x128xf32>
      %68 = vector.shape_cast %67 : vector<1x1x8x128xf32> to vector<8x128xf32>
      %69 = vector.shape_cast %66 : vector<8x128xf32> to vector<1x1x8x128xf32>
      tpu.vector_store %arg4[%c0_39, %c1_40, %c0_41, %c0_42], %69 {strides = array<i32>} : memref<1x3x8x128xf32, #tpu.memory_space<vmem>>, vector<1x1x8x128xf32>,
    } else {
    }
    return
  }
  func.func @transform_0(%arg0: i32, %arg1: i32) -> (i32, i32) {
    %c1_i32 = arith.constant 1 : i32
    %0 = arith.muli %arg0, %c1_i32 : i32
    %1 = arith.addi %0, %arg1 : i32
    %c0_i32 = arith.constant 0 : i32
    %2 = arith.minsi %1, %c0_i32 : i32
    %c0_i32_0 = arith.constant 0 : i32
    %c0_i32_1 = arith.constant 0 : i32
    return %2, %c0_i32_0 : i32, i32
  }
  func.func @transform_1(%arg0: i32, %arg1: i32) -> (i32, i32) {
    %c1_i32 = arith.constant 1 : i32
    %0 = arith.muli %arg0, %c1_i32 : i32
    %1 = arith.addi %0, %arg1 : i32
    %c0_i32 = arith.constant 0 : i32
    %2 = arith.minsi %1, %c0_i32 : i32
    %c0_i32_0 = arith.constant 0 : i32
    %c0_i32_1 = arith.constant 0 : i32
    return %2, %c0_i32_0 : i32, i32
  }
  func.func @transform_2(%arg0: i32, %arg1: i32) -> (i32, i32, i32, i32) {
    %c0_i32 = arith.constant 0 : i32
    %c0_i32_0 = arith.constant 0 : i32
    %c0_i32_1 = arith.constant 0 : i32
    %c0_i32_2 = arith.constant 0 : i32
    return %arg0, %c0_i32, %c0_i32_0, %c0_i32_1 : i32, i32, i32, i32
  }
}

</mosaic_0001>

<llo_original>
// kernel: tpu_custom_call.1
$region0: #{tpu_custom_call.1}
  #allocation0 [shape = 'u32[]', space=smem, size = 0x4, offset = 0x4, fixed_abs, tag = 'smem constant byte address 0x4 - core index']
  #allocation1 [shape = 'u32[144,128]{1,0:T(1,128)}', space=vmem, size = 0x12000, scoped, tag = 'internal scratch']
  %s0 = inlined_call_operand.hbm [shape: f32[8,128], index: 0, kind: input, shape index: {}]
  %s1 = inlined_call_operand.hbm [shape: f32[8,128], index: 1, kind: input, shape index: {}]
  %s2 = inlined_call_operand.hbm [shape: f32[1,3,8,128], index: 2, kind: output, shape index: {}]
  %s3 = sld [smem:[#allocation0]]
  $region38: #{tpu_custom_call.1} parent=0
    _
  %s5 = ssub.s32 1, %s3
  %s6 = scalar_select 0, %s5, %s3
  $region1: #{tpu_custom_call.1} parent=0
    #allocation2 [shape = 'u8[4096]{0}', space=vmem, size = 0x1000, scoped, tag = 'input window, operand 0, single buffered']
    #allocation3 [shape = 's32[1]{0}', space=sflag, size = 0x4, scoped, tag = 'scoped memory for tpu_custom_call.1']
    #allocation4 [shape = 's32[1]{0}', space=sflag, size = 0x4, scoped, tag = 'scoped memory for tpu_custom_call.1']
    #allocation5 [shape = 'u8[4096]{0}', space=vmem, size = 0x1000, scoped, tag = 'input window, operand 1, single buffered']
    #allocation6 [shape = 's32[1]{0}', space=sflag, size = 0x4, scoped, tag = 'scoped memory for tpu_custom_call.1']
    #allocation7 [shape = 'u8[12288]{0}', space=vmem, size = 0x3000, scoped, tag = 'output window, operand 0, single buffered']
    %7 = vsyncpa [#allocation3], 0
    %8 = vsyncpa [#allocation6], 0
    %9 = vsyncpa [#allocation4], 0
    // Predicated region
    $region2: #{tpu_custom_call.1} parent=1 // pred_check
      _
    $region3: #{tpu_custom_call.1} parent=1 // pred_check_branch
      %11 = sbr.rel (0) target = $region5
    $region4: #{tpu_custom_call.1} parent=1 // pred_region
      %s12 = sadd.s32 0, 0
      %p13 = scmp.lt.s32.totalorder %s12, 0
      %s14 = scalar_select %p13, %s12, 0
      %s16 = ssub.s32 128, 128
      %17 = vsyncadd [#allocation3], %s16
      %s18 = smul.addr %s14, 128
      %s19 = scalar_lea.hbm %s0, %s18
      %s21 = sshll.u32 [#allocation2], 4
      %s22 = int_to_ptr.vmem [resolvable:$true] %s21
      %24 = dma.hbm_to_vmem [thread:$0]  %s19, 128, %s22, [#allocation3]
    $region5: #{tpu_custom_call.1} parent=1 // pred_fallthru
      _
    // Predicated region
    $region6: #{tpu_custom_call.1} parent=1 // pred_check
      _
    $region7: #{tpu_custom_call.1} parent=1 // pred_check_branch
      %26 = sbr.rel (0) target = $region9
    $region8: #{tpu_custom_call.1} parent=1 // pred_region
      %s27 = sadd.s32 0, 0
      %p28 = scmp.lt.s32.totalorder %s27, 0
      %s29 = scalar_select %p28, %s27, 0
      %s31 = ssub.s32 128, 128
      %32 = vsyncadd [#allocation6], %s31
      %s33 = smul.addr %s29, 128
      %s34 = scalar_lea.hbm %s1, %s33
      %s36 = sshll.u32 [#allocation5], 4
      %s37 = int_to_ptr.vmem [resolvable:$true] %s36
      %39 = dma.hbm_to_vmem [thread:$0]  %s34, 128, %s37, [#allocation6]
    $region9: #{tpu_custom_call.1} parent=1 // pred_fallthru
      _
    // Predicated region
    $region10: #{tpu_custom_call.1} parent=1 // pred_check
      _
    $region11: #{tpu_custom_call.1} parent=1 // pred_check_branch
      %41 = sbr.rel (0) target = $region13
    $region12: #{tpu_custom_call.1} parent=1 // pred_region
      %42 = dma.done [#allocation3], 128
    $region13: #{tpu_custom_call.1} parent=1 // pred_fallthru
      _
    // Predicated region
    $region14: #{tpu_custom_call.1} parent=1 // pred_check
      _
    $region15: #{tpu_custom_call.1} parent=1 // pred_check_branch
      %44 = sbr.rel (0) target = $region17
    $region16: #{tpu_custom_call.1} parent=1 // pred_region
      %45 = dma.done [#allocation6], 128
    $region17: #{tpu_custom_call.1} parent=1 // pred_fallthru
      _
    %s46 = sadd.s32 0, 0
    %p47 = scmp.lt.s32.totalorder %s46, 0
    %s48 = scalar_select %p47, %s46, 0
    %s49 = sadd.s32 0, 0
    %p50 = scmp.lt.s32.totalorder %s49, 0
    %s51 = scalar_select %p50, %s49, 0
    %s52 = sadd.s32 0, 0
    %s53 = smul.u32 %s52, 8
    %p54 = scmp.eq.s32.totalorder 0, 0
    // Predicated region
    $region18: #{tpu_custom_call.1} parent=1 // pred_check
      %p55 = pneg %p54
    $region19: #{tpu_custom_call.1} parent=1 // pred_check_branch
      %57 = sbr.rel (%p55) target = $region21
    $region20: #{tpu_custom_call.1} parent=1 // pred_region
      %58 = vst [vmem:[#allocation7] sm:$0xff] 0.0
      %59 = vst [vmem:[#allocation7 + $0x8] sm:$0xff] 0.0
      %60 = vst [vmem:[#allocation7 + $0x10] sm:$0xff] 0.0
    $region21: #{tpu_custom_call.1} parent=1 // pred_fallthru
      _
    %s61 = sadd.s32 %s53, 8
    %p62 = scmp.le.s32.totalorder %s61, 8
    // Predicated region
    $region22: #{tpu_custom_call.1} parent=1 // pred_check
      %p63 = pneg %p62
    $region23: #{tpu_custom_call.1} parent=1 // pred_check_branch
      %65 = sbr.rel (%p63) target = $region25
    $region24: #{tpu_custom_call.1} parent=1 // pred_region
      %v66 = vld [vmem:[#allocation2] sm:$0xff]
      %v67 = vld [vmem:[#allocation5] sm:$0xff]
      %s68 = scalar_lea.vmem [#allocation7], 16
      %v69 = vld [vmem:[%s68] sm:$0xff]
      %v70 = vadd.f32 %v67, 0.0
      %v71 = vadd.f32 %v69, %v70
      %72 = vst [vmem:[%s68] sm:$0xff] %v71
      %v73 = vand.u32 2147483647, %v66
      %v74 = vsub.f32 0.0, %v73
      %v75 = vmul.f32 %v74, 1.442695
      %v76 = vpow.pop %v75
      %v77 = vmax.f32 %v66, 0.0
      %v78 = vmul.f32 %v66, %v67
      %v79 = vsub.f32 %v77, %v78
      %v80 = vadd.f32 %v76, 1.0
      %v81 = vlog2.pop %v80
      %v82 = vmul.f32 %v81, 0.6931472
      %v83 = vmul.f32 -0.5, %v76
      %v84 = vadd.f32 %v83, 1.0
      %v85 = vmul.f32 %v84, %v76
      %v86 = vand.u32 2147483647, %v76
      %vm87 = vcmp.lt.f32.partialorder %v86, 0.0004427343
      %v88 = vsel %vm87, %v85, %v82
      %v89 = vadd.f32 %v79, %v88
      %v90 = vld [vmem:[#allocation7] sm:$0xff]
      %v91 = vadd.f32 %v89, 0.0
      %v92 = vadd.f32 %v90, %v91
      %93 = vst [vmem:[#allocation7] sm:$0xff] %v92
      %v94 = vadd.f32 %v76, 1.0
      %v95 = vrcp.pop %v94
      %vm96 = vcmp.ge.f32.partialorder %v66, 0.0
      %v97 = vmul.f32 %v76, %v95
      %v98 = vsel %vm96, %v95, %v97
      %s99 = scalar_lea.vmem [#allocation7], 8
      %v100 = vld [vmem:[%s99] sm:$0xff]
      %v101 = vadd.f32 %v98, 0.0
      %v102 = vadd.f32 %v100, %v101
      %103 = vst [vmem:[%s99] sm:$0xff] %v102
    $region25: #{tpu_custom_call.1} parent=1 // pred_fallthru
      _
    %p104 = scmp.gt.s32.totalorder %s61, 8
    // Predicated region
    $region26: #{tpu_custom_call.1} parent=1 // pred_check
      %p105 = pneg %p104
    $region27: #{tpu_custom_call.1} parent=1 // pred_check_branch
      %107 = sbr.rel (%p105) target = $region29
    $region28: #{tpu_custom_call.1} parent=1 // pred_region
      %v108 = vld [vmem:[#allocation2] sm:$0xff]
      %v109 = vld [vmem:[#allocation5] sm:$0xff]
      %v110 = vlaneseq
      %v111 = vshrl.u32 %v110, 7
      %v112 = vstv %s53
      %v113 = vadd.s32 %v111, %v112
      %vm114 = vcmp.lt.s32.totalorder %v113, 8
      %v115 = vsel %vm114, %v108, 0.0
      %v116 = vsel %vm114, %v109, 0.0
      %s117 = scalar_lea.vmem [#allocation7], 16
      %v118 = vld [vmem:[%s117] sm:$0xff]
      %v119 = vadd.f32 %v116, 0.0
      %v120 = vadd.f32 %v118, %v119
      %121 = vst [vmem:[%s117] sm:$0xff] %v120
      %v122 = vand.u32 2147483647, %v115
      %v123 = vsub.f32 0.0, %v122
      %v124 = vmul.f32 %v123, 1.442695
      %v125 = vpow.pop %v124
      %v126 = vmax.f32 %v115, 0.0
      %v127 = vmul.f32 %v115, %v116
      %v128 = vsub.f32 %v126, %v127
      %v129 = vadd.f32 %v125, 1.0
      %v130 = vlog2.pop %v129
      %v131 = vmul.f32 %v130, 0.6931472
      %v132 = vmul.f32 -0.5, %v125
      %v133 = vadd.f32 %v132, 1.0
      %v134 = vmul.f32 %v133, %v125
      %v135 = vand.u32 2147483647, %v125
      %vm136 = vcmp.lt.f32.partialorder %v135, 0.0004427343
      %v137 = vsel %vm136, %v134, %v131
      %v138 = vadd.f32 %v128, %v137
      %v139 = vsel %vm114, %v138, 0.0
      %v140 = vld [vmem:[#allocation7] sm:$0xff]
      %v141 = vadd.f32 %v139, 0.0
      %v142 = vadd.f32 %v140, %v141
      %143 = vst [vmem:[#allocation7] sm:$0xff] %v142
      %v144 = vadd.f32 %v125, 1.0
      %v145 = vrcp.pop %v144
      %vm146 = vcmp.ge.f32.partialorder %v115, 0.0
      %v147 = vmul.f32 %v125, %v145
      %v148 = vsel %vm146, %v145, %v147
      %v149 = vsel %vm114, %v148, 0.0
      %s150 = scalar_lea.vmem [#allocation7], 8
      %v151 = vld [vmem:[%s150] sm:$0xff]
      %v152 = vadd.f32 %v149, 0.0
      %v153 = vadd.f32 %v151, %v152
      %154 = vst [vmem:[%s150] sm:$0xff] %v153
    $region29: #{tpu_custom_call.1} parent=1 // pred_fallthru
      _
    // Predicated region
    $region30: #{tpu_custom_call.1} parent=1 // pred_check
      _
    $region31: #{tpu_custom_call.1} parent=1 // pred_check_branch
      %156 = sbr.rel (0) target = $region33
    $region32: #{tpu_custom_call.1} parent=1 // pred_region
      %s158 = ssub.s32 384, 384
      %159 = vsyncadd [#allocation4], %s158
      %s160 = sshll.u32 [#allocation7], 4
      %s161 = int_to_ptr.vmem [resolvable:$true] %s160
      %166 = dma.vmem_to_hbm [thread:$0]  %s161, 384, %s2, [#allocation4], 128, 128, 8
    $region33: #{tpu_custom_call.1} parent=1 // pred_fallthru
      _
    // Predicated region
    $region34: #{tpu_custom_call.1} parent=1 // pred_check
      _
    $region35: #{tpu_custom_call.1} parent=1 // pred_check_branch
      %168 = sbr.rel (0) target = $region37
    $region36: #{tpu_custom_call.1} parent=1 // pred_region
      %169 = dma.done [#allocation4], 384
    $region37: #{tpu_custom_call.1} parent=1 // pred_fallthru
      _
    %170 = vsyncpa [#allocation3], 1
    %171 = vsyncpa [#allocation6], 1
    %172 = vsyncpa [#allocation4], 1

</llo_original>
